<compile_context>
chip_gen: v7x
topology: tpu7x:2x2x1
jax: 0.10.0
libtpu: 0.0.40
codegen_flags: <defaults>
</compile_context>

<pallas_src>
import functools

import jax
import jax.numpy as jnp
from jax.experimental import pallas as pl
from jax.experimental.pallas import tpu as pltpu


_LANE = 128


def _tanhexp_kernel(x_ref, o_ref, *, compute_dtype):
    x = x_ref[...].astype(compute_dtype)
    # Exactly one EUP exp + one EUP tanh per element; do NOT rewrite tanh via
    # exp/sigmoid identities (that would raise the EUP count to 3/element).
    o_ref[...] = (x * jnp.tanh(jnp.exp(x))).astype(o_ref.dtype)


def _chip_generation() -> int:
    """Best-effort TPU generation from device_kind; defaults to 6 (modern)."""
    try:
        kind = jax.devices()[0].device_kind.lower()
    except Exception:
        return 6
    for gen in (7, 6, 5, 4):
        if f"v{gen}" in kind or f"tpu{gen}" in kind:
            return gen
    return 6


def _choose_width(total: int) -> int:
    """Widest lane dimension (multiple of 128, <= 8192) dividing `total`."""
    for c in (8192, 4096, 2048, 1024, 512, 256, 128):
        if total % c == 0:
            return c
    return _LANE


def _choose_block_rows(rows: int, width: int, itemsize: int,
                       target_block_bytes: int) -> int:
    """Row tile near the per-chip byte target, aligned to the native sublane tile."""
    # Native sublane packing: f32 -> 8, bf16/f16 -> 16, int8/fp8 -> 32.
    sub = max(8, 32 // itemsize)
    target = (target_block_bytes // (width * itemsize)) // sub * sub
    target = max(sub, target)
    # Keep both v7x TensorCores busy: prefer >= 2 grid steps whenever the row
    # dimension is splittable at sublane granularity (negligible cost on 1-TC chips).
    if rows >= 2 * sub:
        half = (((rows + 1) // 2) + sub - 1) // sub * sub
        target = min(target, half)
    if target >= rows:
        return rows  # single full-extent block (legal regardless of alignment)
    # Prefer an exact divisor near the target (no ragged last block), but never
    # shrink below ~75% of the target just to avoid one masked partial block.
    lo = max(sub, (target * 3 // 4) // sub * sub)
    for cand in range(target, lo - 1, -sub):
        if rows % cand == 0:
            return cand
    for cand in range(target + sub, target + target // 2 + 1, sub):
        if cand < rows and rows % cand == 0:
            return cand
    return target  # ragged last block is masked by Pallas


def _run_2d(x2d, *, compute_dtype, target_block_bytes, vmem_limit_bytes,
            donate=False):
    rows, width = x2d.shape
    itemsize = jnp.dtype(x2d.dtype).itemsize
    br = _choose_block_rows(rows, width, itemsize, target_block_bytes)
    grid = (pl.cdiv(rows, br),)
    n = rows * width

    kernel = functools.partial(_tanhexp_kernel, compute_dtype=compute_dtype)
    cp_kwargs = dict(dimension_semantics=("parallel",))
    if vmem_limit_bytes is not None:
        cp_kwargs["vmem_limit_bytes"] = vmem_limit_bytes

    return pl.pallas_call(
        kernel,
        out_shape=jax.ShapeDtypeStruct((rows, width), x2d.dtype),
        grid_spec=pltpu.PrefetchScalarGridSpec(
            num_scalar_prefetch=0,
            grid=grid,
            in_specs=[pl.BlockSpec((br, width), lambda i: (i, 0))],
            out_specs=pl.BlockSpec((br, width), lambda i: (i, 0)),
        ),
        compiler_params=pltpu.CompilerParams(**cp_kwargs),
        cost_estimate=pl.CostEstimate(
            flops=n, transcendentals=2 * n, bytes_accessed=2 * n * itemsize),
        input_output_aliases=({0: 0} if donate else {}),
    )(x2d)


def tanhexp(x: jax.Array, *, donate: bool = False) -> jax.Array:
    """Applies TanhExp elementwise; accepts any shape (e.g. NCHW)."""
    orig_shape = x.shape
    orig_dtype = x.dtype
    total = x.size
    if total == 0:
        return x

    gen = _chip_generation()

    # bf16 compute only where the VPU/EUP are natively bf16 (v6e/v7x); v5e and
    # older upcast to f32 (HBM traffic stays in the storage dtype either way).
    if orig_dtype == jnp.bfloat16 and gen >= 6:
        compute_dtype = jnp.bfloat16
    else:
        compute_dtype = jnp.float32

    if gen >= 6:
        target_block_bytes = 4 * 1024 * 1024   # 4 bufs x 4 MiB = 16 MiB << 32 MiB limit
        vmem_limit_bytes = 32 * 1024 * 1024
    elif gen == 5:
        target_block_bytes = 3 * 1024 * 1024   # v5e scoped default is only 16 MiB
        vmem_limit_bytes = 24 * 1024 * 1024
    else:
        target_block_bytes = 2 * 1024 * 1024
        vmem_limit_bytes = None

    run = functools.partial(
        _run_2d,
        compute_dtype=compute_dtype,
        target_block_bytes=target_block_bytes,
        vmem_limit_bytes=vmem_limit_bytes,
    )

    x_flat = x.reshape(-1)

    if total % _LANE == 0:
        # Common case: zero-copy reshape to a lane-dense 2D slab, no padding.
        width = _choose_width(total)
        out2d = run(x_flat.reshape(total // width, width), donate=donate)
        return out2d.reshape(orig_shape)

    # Rare path (element count not a multiple of 128): main kernel over the
    # 128-aligned bulk, tiny kernel over the <128-element tail, then stitch.
    # TODO(synk): the bulk slice + concatenate still cost one extra HBM pass
    # each; removing them needs 1D/ANY-space blocks which Mosaic handles poorly.
    bulk = (total // _LANE) * _LANE
    tail = total - bulk
    pieces = []
    if bulk:
        width = _choose_width(bulk)
        pieces.append(
            run(x_flat[:bulk].reshape(bulk // width, width)).reshape(-1))
    x_tail = jnp.pad(x_flat[bulk:], (0, _LANE - tail)).reshape(1, _LANE)
    pieces.append(run(x_tail).reshape(-1)[:tail])
    out_flat = jnp.concatenate(pieces) if len(pieces) > 1 else pieces[0]
    return out_flat.reshape(orig_shape)


if __name__ == "__main__":
    key = jax.random.PRNGKey(0)
    # NCHW input, small shapes: batch=2, channels=4, spatial=16x16
    x = jax.random.normal(key, (2, 4, 16, 16), dtype=jnp.float32)

    y = jax.jit(tanhexp)(x)
    y = jax.block_until_ready(y)

    # reference check in plain JAX
    y_ref = x * jnp.tanh(jnp.exp(x))
    assert y.shape == x.shape and y.dtype == x.dtype
    assert jnp.allclose(y, y_ref, atol=1e-5, rtol=1e-5)

    print("KERNEL_OK")
</pallas_src>

<mosaic_0001>
module attributes {stable_mosaic.version = 11 : i64} {
  func.func @_tanhexp_kernel(%arg0: i32, %arg1: memref<1x2048xf32, #tpu.memory_space<vmem>>, %arg2: memref<1x2048xf32, #tpu.memory_space<vmem>>) attributes {dimension_semantics = [#tpu.dimension_semantics<parallel>], iteration_bounds = array<i64: 1>, scalar_prefetch = 0 : i64, scratch_operands = 0 : i64, tpu.core_type = #tpu.core_type<tc>, window_params = [{transform_indices = @transform_0, window_bounds = array<i64: 1, 2048>}, {transform_indices = @transform_1, window_bounds = array<i64: 1, 2048>}]} {
    %c0 = arith.constant 0 : index
    %c0_0 = arith.constant 0 : index
    %0 = vector.load %arg1[%c0, %c0_0] : memref<1x2048xf32, #tpu.memory_space<vmem>>, vector<1x2048xf32>
    %1 = math.exp %0 : vector<1x2048xf32>
    %2 = math.tanh %1 : vector<1x2048xf32>
    %3 = arith.mulf %0, %2 : vector<1x2048xf32>
    %c0_1 = arith.constant 0 : index
    %c0_2 = arith.constant 0 : index
    %4 = vector.load %arg2[%c0_1, %c0_2] : memref<1x2048xf32, #tpu.memory_space<vmem>>, vector<1x2048xf32>
    tpu.vector_store %arg2[%c0_1, %c0_2], %3 {strides = array<i32>} : memref<1x2048xf32, #tpu.memory_space<vmem>>, vector<1x2048xf32>,
    return
  }
  func.func @transform_0(%arg0: i32) -> (i32, i32) {
    %c0_i32 = arith.constant 0 : i32
    %c0_i32_0 = arith.constant 0 : i32
    return %arg0, %c0_i32 : i32, i32
  }
  func.func @transform_1(%arg0: i32) -> (i32, i32) {
    %c0_i32 = arith.constant 0 : i32
    %c0_i32_0 = arith.constant 0 : i32
    return %arg0, %c0_i32 : i32, i32
  }
}

</mosaic_0001>

<llo_original>
// kernel: tanhexp.1
$region0: #{tanhexp.1}
  #allocation0 [shape = 'u32[]', space=smem, size = 0x4, offset = 0x4, fixed_abs, tag = 'smem constant byte address 0x4 - core index']
  #allocation1 [shape = 'u32[144,128]{1,0:T(1,128)}', space=vmem, size = 0x12000, scoped, tag = 'internal scratch']
  %s0 = inlined_call_operand.vmem [shape: f32[1,2048], index: 0, kind: input, shape index: {}]
  %s1 = inlined_call_operand.vmem [shape: f32[1,2048], index: 1, kind: output, shape index: {}]
  %s2 = sld [smem:[#allocation0]]
  $region14: #{tanhexp.1} parent=0
    _
  %s4 = ssub.s32 1, %s2
  %s5 = scalar_select 0, %s4, %s2
  // Predicated region
  $region2: #{tanhexp.1} parent=0 // pred_check
    _
  $region3: #{tanhexp.1} parent=0 // pred_check_branch
    %7 = sbr.rel (0) target = $region5
  $region4: #{tanhexp.1} parent=0 // pred_region
    _
  $region5: #{tanhexp.1} parent=0 // pred_fallthru
    _
  %v8 = vld [vmem:[%s0] sm:$0xff]
  %v9 = vld [vmem:[%s0 + $0x8] sm:$0xff]
  %v10 = vmul.f32 %v8, 1.442695
  %v11 = vpow.pop %v10
  %v12 = vmul.f32 %v9, 1.442695
  %v13 = vpow.pop %v12
  %v14 = vtanh.pop %v11
  %v15 = vtanh.pop %v13
  %v16 = vmul.f32 %v8, %v14
  %v17 = vmul.f32 %v9, %v15
  %18 = vst [vmem:[%s1] sm:$0xff] %v16
  %19 = vst [vmem:[%s1 + $0x8] sm:$0xff] %v17
  // Predicated region
  $region6: #{tanhexp.1} parent=0 // pred_check
    _
  $region7: #{tanhexp.1} parent=0 // pred_check_branch
    %21 = sbr.rel (0) target = $region9
  $region8: #{tanhexp.1} parent=0 // pred_region
    _
  $region9: #{tanhexp.1} parent=0 // pred_fallthru
    _
  // Predicated region
  $region10: #{tanhexp.1} parent=0 // pred_check
    _
  $region11: #{tanhexp.1} parent=0 // pred_check_branch
    %23 = sbr.rel (0) target = $region13
  $region12: #{tanhexp.1} parent=0 // pred_region
    _
  $region13: #{tanhexp.1} parent=0 // pred_fallthru
    _

</llo_original>
